<compile_context>
chip_gen: v7x
topology: tpu7x:2x2x1
jax: 0.10.0
libtpu: 0.0.40
codegen_flags: <defaults>
</compile_context>

<pallas_src>
import functools
import math

import jax
import jax.numpy as jnp
from jax.experimental import pallas as pl
from jax.experimental.pallas import tpu as pltpu


def _vmem_limit_bytes():
    """Scoped-VMEM limit: half of physical VMEM, capped at 64 MiB.
    -> 64 MiB on 128-MiB parts (v5e/v6e), 32 MiB on v7x (64 MiB/TC),
       32 MiB if the hardware query is unavailable."""
    try:
        cap = getattr(pltpu.get_tpu_info(), "vmem_capacity_bytes", None)
    except Exception:
        cap = None
    if not cap:
        cap = 64 * 1024 * 1024
    return min(cap // 2, 64 * 1024 * 1024)


_VMEM_LIMIT = _vmem_limit_bytes()
_VMEM_BUDGET = _VMEM_LIMIT // 2  # double-buffered working-set budget


def _add_pe_kernel(x_ref, pe_ref, o_ref):
    # x_ref: (b, tr, c); pe_ref: (tr, c) -> broadcasts over the resident batch
    # dim; a single VPU add per block.
    o_ref[...] = (x_ref[...] + pe_ref[...]).astype(o_ref.dtype)


def _pick_tr(r, sub_mult, max_rows):
    """Rows per block along the fused spatial axis.

    Goals:
      * multiple of sub_mult (sublane granularity) or the full extent,
      * fits the double-buffered VMEM budget (<= max_rows),
      * grid extent >= 2 whenever r allows (v7x megacore, pipelined DMA),
      * >= 4 grid steps only when tiles stay >= ~512 rows (v5e/v6e hit ~85%
        of HBM roofline at 512-row tiles; smaller only adds per-step cost).
    """
    def _round_up(v):
        return ((v + sub_mult - 1) // sub_mult) * sub_mult

    if r <= sub_mult:
        return r  # single tiny block; full extent is always legal
    budget_tr = max(sub_mult, (max_rows // sub_mult) * sub_mult)
    four_step = _round_up(-(-r // 4))   # ceil(r/4) -> >= 4 grid steps
    two_step = _round_up(-(-r // 2))    # ceil(r/2) -> >= 2 grid steps
    tr = four_step if four_step >= 512 else two_step
    return max(sub_mult, min(tr, budget_tr))


@functools.partial(jax.jit, static_argnames=("retp",))
def learnt_positional_embedding(x, pe, retp=False):
    """x: (b, *r, c); pe: (1, *resolut, c) with resolut[i] >= r[i].

    Returns x + pe[:, :r0, :r1, ..., :] (and optionally the sliced pe),
    exactly like the PyTorch module's forward.
    """
    b = x.shape[0]
    spatial = x.shape[1:-1]
    c = x.shape[-1]

    # Slice pe to the input spatial extent (static slices, like the module's
    # eval'd slicing), then merge spatial dims and match x's dtype (pe is tiny).
    pe_sliced = pe[(slice(None),) + tuple(slice(0, s) for s in spatial) + (slice(None),)]

    r = math.prod(spatial) if spatial else 1
    # Merge ONLY the leading spatial dims; keep the channel dim as the lane
    # dim to avoid HBM relayout copies (see header comment).
    x_k = x.reshape(b, r, c)
    pe_k = pe_sliced.reshape(r, c).astype(x.dtype)

    itemsize = jnp.dtype(x.dtype).itemsize
    sub_mult = 8 * max(1, 4 // itemsize)  # 8 for f32, 16 for bf16, 32 for int8

    # VMEM budget: x block + out block + pe block, double-buffered.
    row_bytes = c * (2 * b + 1) * itemsize
    max_rows = max(sub_mult, _VMEM_BUDGET // (2 * row_bytes))
    tr = _pick_tr(r, sub_mult, max_rows)
    grid = (pl.cdiv(r, tr),)  # partial last block is handled by Pallas masking

    out_flat = pl.pallas_call(
        _add_pe_kernel,
        out_shape=jax.ShapeDtypeStruct((b, r, c), x.dtype),
        grid_spec=pltpu.PrefetchScalarGridSpec(
            num_scalar_prefetch=0,
            grid=grid,
            in_specs=[
                pl.BlockSpec((b, tr, c), lambda i: (0, i, 0)),
                pl.BlockSpec((tr, c), lambda i: (i, 0)),  # pe: once per tile
            ],
            out_specs=pl.BlockSpec((b, tr, c), lambda i: (0, i, 0)),
        ),
        compiler_params=pltpu.CompilerParams(
            dimension_semantics=("parallel",),
            vmem_limit_bytes=_VMEM_LIMIT,
        ),
        cost_estimate=pl.CostEstimate(
            flops=b * r * c,
            transcendentals=0,
            bytes_accessed=(2 * b + 1) * r * c * itemsize,
        ),
    )(x_k, pe_k)

    out = out_flat.reshape(x.shape)
    if retp:
        return out, pe_sliced
    return out


def init_pe(key, resolut, embed_dim, dtype=jnp.float32):
    # nn.init.trunc_normal_ default: mean=0, std=1, truncated to [-2, 2].
    shape = (1, *resolut, embed_dim)
    return jax.random.truncated_normal(key, -2.0, 2.0, shape, dtype)


if __name__ == "__main__":
    key = jax.random.PRNGKey(0)
    k_pe, k_x, k_pe2, k_x2 = jax.random.split(key, 4)

    # Case 1: embed_dim below 128, 16x16 spatial grid, batch 2.
    resolut = (16, 16)
    embed_dim = 32
    batch = 2
    pe = init_pe(k_pe, resolut, embed_dim)
    x = jax.random.normal(k_x, (batch, *resolut, embed_dim), jnp.float32)

    out, pe_used = learnt_positional_embedding(x, pe, retp=True)
    out = jax.block_until_ready(out)

    ref = x + pe[:, :16, :16, :]
    assert out.shape == x.shape
    assert jnp.allclose(out, ref, atol=1e-6, rtol=1e-6)
    assert jnp.allclose(pe_used, pe[:, :16, :16, :])

    # Case 2: input spatial extent smaller than the pe resolution (14x14) and
    # row count not a multiple of 8 -> exercises the cdiv / partial-block path.
    x_small = jax.random.normal(k_x, (batch, 14, 14, embed_dim), jnp.float32)
    out_small = jax.block_until_ready(learnt_positional_embedding(x_small, pe))
    ref_small = x_small + pe[:, :14, :14, :]
    assert jnp.allclose(out_small, ref_small, atol=1e-6, rtol=1e-6)

    # Case 3: lane-dense channel dim (multiple of 128) -> full unmasked stores.
    pe2 = init_pe(k_pe2, (8, 8), 256)
    x2 = jax.random.normal(k_x2, (batch, 8, 8, 256), jnp.float32)
    out2 = jax.block_until_ready(learnt_positional_embedding(x2, pe2))
    ref2 = x2 + pe2
    assert jnp.allclose(out2, ref2, atol=1e-6, rtol=1e-6)

    print("KERNEL_OK")
</pallas_src>

<mosaic_0001>
module attributes {stable_mosaic.version = 11 : i64} {
  func.func @_add_pe_kernel(%arg0: i32, %arg1: memref<2x128x32xf32, #tpu.memory_space<vmem>>, %arg2: memref<128x32xf32, #tpu.memory_space<vmem>>, %arg3: memref<2x128x32xf32, #tpu.memory_space<vmem>>) attributes {dimension_semantics = [#tpu.dimension_semantics<parallel>], iteration_bounds = array<i64: 2>, scalar_prefetch = 0 : i64, scratch_operands = 0 : i64, tpu.core_type = #tpu.core_type<tc>, window_params = [{transform_indices = @transform_0, window_bounds = array<i64: 2, 128, 32>}, {transform_indices = @transform_1, window_bounds = array<i64: 128, 32>}, {transform_indices = @transform_2, window_bounds = array<i64: 2, 128, 32>}]} {
    %c0 = arith.constant 0 : index
    %c0_0 = arith.constant 0 : index
    %c0_1 = arith.constant 0 : index
    %0 = vector.load %arg1[%c0, %c0_0, %c0_1] : memref<2x128x32xf32, #tpu.memory_space<vmem>>, vector<2x128x32xf32>
    %c0_2 = arith.constant 0 : index
    %c0_3 = arith.constant 0 : index
    %1 = vector.load %arg2[%c0_2, %c0_3] : memref<128x32xf32, #tpu.memory_space<vmem>>, vector<128x32xf32>
    %2 = vector.shape_cast %1 : vector<128x32xf32> to vector<1x128x32xf32>
    %3 = vector.broadcast %2 : vector<1x128x32xf32> to vector<2x128x32xf32>
    %4 = arith.addf %0, %3 : vector<2x128x32xf32>
    %c0_4 = arith.constant 0 : index
    %c0_5 = arith.constant 0 : index
    %c0_6 = arith.constant 0 : index
    %5 = vector.load %arg3[%c0_4, %c0_5, %c0_6] : memref<2x128x32xf32, #tpu.memory_space<vmem>>, vector<2x128x32xf32>
    tpu.vector_store %arg3[%c0_4, %c0_5, %c0_6], %4 {strides = array<i32>} : memref<2x128x32xf32, #tpu.memory_space<vmem>>, vector<2x128x32xf32>,
    return
  }
  func.func @transform_0(%arg0: i32) -> (i32, i32, i32) {
    %c0_i32 = arith.constant 0 : i32
    %c0_i32_0 = arith.constant 0 : i32
    %c0_i32_1 = arith.constant 0 : i32
    return %c0_i32, %arg0, %c0_i32_0 : i32, i32, i32
  }
  func.func @transform_1(%arg0: i32) -> (i32, i32) {
    %c0_i32 = arith.constant 0 : i32
    %c0_i32_0 = arith.constant 0 : i32
    return %arg0, %c0_i32 : i32, i32
  }
  func.func @transform_2(%arg0: i32) -> (i32, i32, i32) {
    %c0_i32 = arith.constant 0 : i32
    %c0_i32_0 = arith.constant 0 : i32
    %c0_i32_1 = arith.constant 0 : i32
    return %c0_i32, %arg0, %c0_i32_0 : i32, i32, i32
  }
}

</mosaic_0001>

<llo_original>
// kernel: learnt_positional_embedding.1
$region0: #{learnt_positional_embedding.1}
  #allocation0 [shape = 'u32[]', space=smem, size = 0x4, offset = 0x4, fixed_abs, tag = 'smem constant byte address 0x4 - core index']
  #allocation1 [shape = 'u32[144,128]{1,0:T(1,128)}', space=vmem, size = 0x12000, scoped, tag = 'internal scratch']
  #allocation8 [shape = 's32[]', space=sflag, size = 0x4, offset = 0, fixed_abs, tag = 'sflag constant byte address 0x0 - dummy sync flag']
  #allocation10 [shape = 's32[]', space=sflag, size = 0x4, offset = 0, fixed_abs, tag = 'sflag constant byte address 0x0 - dummy sync flag']
  %s0 = inlined_call_operand.hbm [shape: f32[2,256,32], index: 0, kind: input, shape index: {}]
  %s1 = inlined_call_operand.hbm [shape: f32[256,32], index: 1, kind: input, shape index: {}]
  %s2 = inlined_call_operand.hbm [shape: f32[2,256,32], index: 2, kind: output, shape index: {}]
  %s3 = sld [smem:[#allocation0]]
  $region49: #{learnt_positional_embedding.1} parent=0
    _
  %s5 = ssub.s32 1, %s3
  %s6 = scalar_select 0, %s5, %s3
  $region1: #{learnt_positional_embedding.1} parent=0
    #allocation2 [shape = 'u8[262144]{0}', space=vmem, size = 0x40000, scoped, tag = 'input window, operand 0']
    #allocation3 [shape = 's32[2]{0}', space=sflag, size = 0x8, scoped, tag = 'scoped memory for learnt_positional_embedding.1']
    #allocation4 [shape = 's32[2]{0}', space=sflag, size = 0x8, scoped, tag = 'scoped memory for learnt_positional_embedding.1']
    #allocation5 [shape = 'u8[131072]{0}', space=vmem, size = 0x20000, scoped, tag = 'input window, operand 1']
    #allocation6 [shape = 's32[2]{0}', space=sflag, size = 0x8, scoped, tag = 'scoped memory for learnt_positional_embedding.1']
    #allocation7 [shape = 'u8[262144]{0}', space=vmem, size = 0x40000, scoped, tag = 'output window, operand 0']
    %7 = vsyncpa [#allocation3], 0
    %s8 = scalar_lea.sflag [#allocation3], 1
    %9 = vsyncpa %s8, 0
    %10 = vsyncpa [#allocation6], 0
    %s11 = scalar_lea.sflag [#allocation6], 1
    %12 = vsyncpa %s11, 0
    %13 = vsyncpa [#allocation4], 0
    %s14 = scalar_lea.sflag [#allocation4], 1
    %15 = vsyncpa %s14, 0
    loop: start=0, step=1, limit=4
    $region2: #{learnt_positional_embedding.1} parent=1 // loop_pre_header
      _
    $region3: #{learnt_positional_embedding.1} parent=1 // loop_header
      %s17 = sphi 0, %s21
      %p18 = scmp.ge.s32.totalorder %s17, 4
      %s27 = sphi 0, %s29
      %s30 = sphi 0, %s27
      %s31 = sphi 0, %s30
      %s47 = sphi 0, %s31
      %s53 = sphi 0, %s55
      %s56 = sphi 0, %s53
      %s57 = sphi 0, %s56
      %s73 = sphi 0, %s57
      %s79 = sphi 0, %s81
      %s82 = sphi 0, %s79
      %s83 = sphi 0, %s82
      %s99 = sphi 0, %s83
    $region4: #{learnt_positional_embedding.1} parent=1 // loop_header_branch
      %20 = sbr.rel (%p18) target = $region8
    $region5: #{learnt_positional_embedding.1} parent=1 // loop_body
      %s22 = ssub.s32 %s17, 1
      %s23 = ssub.s32 %s17, 2
      %s24 = sadd.s32 %s17, 1
      %s25 = ssub.s32 %s17, %s24
      %p26 = scmp.eq.s32.totalorder %s25, 0
      %s28 = sadd.s32 %s27, 1
      %s29 = scalar_select %p26, %s27, %s28
      %p32 = pneg %p26
      %p33 = scmp.eq.s32.totalorder %s17, 1
      %p34 = por %p32, %p33
      %p35 = scmp.ne.s32.totalorder %s27, %s30
      %p36 = scmp.eq.s32.totalorder %s17, 0
      %p37 = por %p35, %p36
      %p38 = scmp.ne.s32.totalorder %s27, %s30
      %p39 = scmp.eq.s32.totalorder %s22, 1
      %p40 = por %p38, %p39
      %p41 = scmp.ne.s32.totalorder %s30, %s31
      %p42 = scmp.eq.s32.totalorder %s22, 0
      %p43 = por %p41, %p42
      %p44 = scmp.ne.s32.totalorder %s30, %s31
      %p45 = scmp.eq.s32.totalorder %s23, 1
      %p46 = por %p44, %p45
      %p48 = scmp.ne.s32.totalorder %s31, %s47
      %p49 = scmp.eq.s32.totalorder %s23, 0
      %p50 = por %p48, %p49
      %s51 = ssub.s32 %s17, %s24
      %p52 = scmp.eq.s32.totalorder %s51, 0
      %s54 = sadd.s32 %s53, 1
      %s55 = scalar_select %p52, %s53, %s54
      %p58 = pneg %p52
      %p59 = scmp.eq.s32.totalorder %s17, 1
      %p60 = por %p58, %p59
      %p61 = scmp.ne.s32.totalorder %s53, %s56
      %p62 = scmp.eq.s32.totalorder %s17, 0
      %p63 = por %p61, %p62
      %p64 = scmp.ne.s32.totalorder %s53, %s56
      %p65 = scmp.eq.s32.totalorder %s22, 1
      %p66 = por %p64, %p65
      %p67 = scmp.ne.s32.totalorder %s56, %s57
      %p68 = scmp.eq.s32.totalorder %s22, 0
      %p69 = por %p67, %p68
      %p70 = scmp.ne.s32.totalorder %s56, %s57
      %p71 = scmp.eq.s32.totalorder %s23, 1
      %p72 = por %p70, %p71
      %p74 = scmp.ne.s32.totalorder %s57, %s73
      %p75 = scmp.eq.s32.totalorder %s23, 0
      %p76 = por %p74, %p75
      %s77 = ssub.s32 %s17, %s24
      %p78 = scmp.eq.s32.totalorder %s77, 0
      %s80 = sadd.s32 %s79, 1
      %s81 = scalar_select %p78, %s79, %s80
      %p84 = pneg %p78
      %p85 = scmp.eq.s32.totalorder %s17, 1
      %p86 = por %p84, %p85
      %p87 = scmp.ne.s32.totalorder %s79, %s82
      %p88 = scmp.eq.s32.totalorder %s17, 0
      %p89 = por %p87, %p88
      %p90 = scmp.ne.s32.totalorder %s79, %s82
      %p91 = scmp.eq.s32.totalorder %s22, 1
      %p92 = por %p90, %p91
      %p93 = scmp.ne.s32.totalorder %s82, %s83
      %p94 = scmp.eq.s32.totalorder %s22, 0
      %p95 = por %p93, %p94
      %p96 = scmp.ne.s32.totalorder %s82, %s83
      %p97 = scmp.eq.s32.totalorder %s23, 1
      %p98 = por %p96, %p97
      %p100 = scmp.ne.s32.totalorder %s83, %s99
      %p101 = scmp.eq.s32.totalorder %s23, 0
      %p102 = por %p100, %p101
      %p103 = scmp.le.s32.totalorder 1, %s17
      %p104 = scmp.lt.s32.totalorder %s17, 3
      %p105 = pnand %p103, %p104
      %p106 = pneg %p105
      // Predicated region
      $region9: #{learnt_positional_embedding.1} parent=5 // pred_check
        _
      $region10: #{learnt_positional_embedding.1} parent=5 // pred_check_branch
        %108 = sbr.rel (%p105) target = $region12
      $region11: #{learnt_positional_embedding.1} parent=5 // pred_region
        %s109 = ssub.s32 %s17, 1
      $region12: #{learnt_positional_embedding.1} parent=5 // pred_fallthru
        _
      %p110 = scmp.lt.s32.totalorder %s17, 2
      // Predicated region
      $region13: #{learnt_positional_embedding.1} parent=5 // pred_check
        %p111 = pneg %p110
      $region14: #{learnt_positional_embedding.1} parent=5 // pred_check_branch
        %113 = sbr.rel (%p111) target = $region16
      $region15: #{learnt_positional_embedding.1} parent=5 // pred_region
        // Predicated region
        $region17: #{learnt_positional_embedding.1} parent=15 // pred_check
          %p114 = pneg %p37
        $region18: #{learnt_positional_embedding.1} parent=15 // pred_check_branch
          %116 = sbr.rel (%p114) target = $region20
        $region19: #{learnt_positional_embedding.1} parent=15 // pred_region
          #allocation9 [shape = 'u32[6]{0}', space=smem, size = 0x18, scoped, tag = 'DMA stride descriptor']
          %s117 = sand.u32 %s27, 1
          %s118 = scalar_lea.sflag [#allocation3], %s117
          %s119 = sand.u32 %s27, 1
          %s120 = smul.addr %s119, 256
          %s121 = scalar_lea.vmem [#allocation2], %s120
          %s122 = smul.u32 16, %s17
          %s124 = ssub.s32 4096, 4096
          %125 = vsyncadd %s118, %s124
          %s126 = smul.addr %s122, 128
          %s127 = scalar_lea.hbm %s0, %s126
          %s129 = sshll.u32 1, 14
          %s130 = sxor.u32 4294967295, %s129
          %s132 = sld [smem:[#allocation0]]
          %s133 = sadd.s32 2, %s132
          %s135 = sshll.u32 7, 26
          %s136 = sxor.u32 4294967295, %s135
          %s137 = sand.u32 0, %s136
          %s138 = sshll.u32 %s133, 26
          %s139 = sor.u32 %s137, %s138
          %s140 = sshll.u32 %s121, 4
          %s141 = int_to_ptr.vmem [resolvable:$true] %s140
          %147 = sst [smem:[#allocation9]] 4096
          %s148 = scalar_lea.smem [#allocation9], 1
          %149 = sst [smem:[%s148]] 2048
          %s150 = scalar_lea.smem [#allocation9], 2
          %151 = sst [smem:[%s150]] 16
          %s152 = scalar_lea.smem [#allocation9], 3
          %153 = sst [smem:[%s152]] 128
          %s154 = scalar_lea.smem [#allocation9], 4
          %155 = sst [smem:[%s154]] 128
          %s156 = scalar_lea.smem [#allocation9], 5
          %157 = sst [smem:[%s156]] 8
          %159 = dma.general %s127, 4096, %s141, %s118, [#allocation8], [#allocation9], %s139, 0
        $region20: #{learnt_positional_embedding.1} parent=15 // pred_fallthru
          _
        // Predicated region
        $region21: #{learnt_positional_embedding.1} parent=15 // pred_check
          %p160 = pneg %p63
        $region22: #{learnt_positional_embedding.1} parent=15 // pred_check_branch
          %162 = sbr.rel (%p160) target = $region24
        $region23: #{learnt_positional_embedding.1} parent=15 // pred_region
          %s163 = sand.u32 %s53, 1
          %s164 = scalar_lea.sflag [#allocation6], %s163
          %s165 = sand.u32 %s53, 1
          %s166 = smul.addr %s165, 128
          %s167 = scalar_lea.vmem [#allocation5], %s166
          %s168 = smul.u32 16, %s17
          %s170 = ssub.s32 2048, 2048
          %171 = vsyncadd %s164, %s170
          %s172 = smul.addr %s168, 128
          %s173 = scalar_lea.hbm %s1, %s172
          %s174 = sshll.u32 %s167, 4
          %s175 = int_to_ptr.vmem [resolvable:$true] %s174
          %180 = dma.hbm_to_vmem [thread:$0]  %s173, 2048, %s175, %s164, 128, 128, 8
        $region24: #{learnt_positional_embedding.1} parent=15 // pred_fallthru
          _
      $region16: #{learnt_positional_embedding.1} parent=5 // pred_fallthru
        _
      %p181 = scmp.le.s32.totalorder 1, %s17
      %p182 = scmp.lt.s32.totalorder %s17, 3
      %p183 = pnand %p181, %p182
      %p184 = pneg %p183
      // Predicated region
      $region25: #{learnt_positional_embedding.1} parent=5 // pred_check
        _
      $region26: #{learnt_positional_embedding.1} parent=5 // pred_check_branch
        %186 = sbr.rel (%p183) target = $region28
      $region27: #{learnt_positional_embedding.1} parent=5 // pred_region
        %s187 = ssub.s32 %s17, 1
        %s188 = sand.u32 %s30, 1
        %s189 = scalar_lea.sflag [#allocation3], %s188
        %s190 = sand.u32 %s30, 1
        %s191 = smul.addr %s190, 256
        %s192 = scalar_lea.vmem [#allocation2], %s191
        // Predicated region
        $region29: #{learnt_positional_embedding.1} parent=27 // pred_check
          %p193 = pneg %p43
        $region30: #{learnt_positional_embedding.1} parent=27 // pred_check_branch
          %195 = sbr.rel (%p193) target = $region32
        $region31: #{learnt_positional_embedding.1} parent=27 // pred_region
          %196 = dma.done %s189, 4096
        $region32: #{learnt_positional_embedding.1} parent=27 // pred_fallthru
          _
        %s197 = sand.u32 %s56, 1
        %s198 = scalar_lea.sflag [#allocation6], %s197
        %s199 = sand.u32 %s56, 1
        %s200 = smul.addr %s199, 128
        %s201 = scalar_lea.vmem [#allocation5], %s200
        // Predicated region
        $region33: #{learnt_positional_embedding.1} parent=27 // pred_check
          %p202 = pneg %p69
        $region34: #{learnt_positional_embedding.1} parent=27 // pred_check_branch
          %204 = sbr.rel (%p202) target = $region36
        $region35: #{learnt_positional_embedding.1} parent=27 // pred_region
          %205 = dma.done %s198, 2048
        $region36: #{learnt_positional_embedding.1} parent=27 // pred_fallthru
          _
        %s206 = sand.u32 %s30, 1
        %s207 = scalar_lea.sflag [#allocation3], %s206
        %s208 = sand.u32 %s30, 1
        %s209 = smul.addr %s208, 256
        %s210 = scalar_lea.vmem [#allocation2], %s209
        %p211 = pneg %p43
        %p212 = pneg %p40
        %s213 = sand.u32 %s56, 1
        %s214 = scalar_lea.sflag [#allocation6], %s213
        %s215 = sand.u32 %s56, 1
        %s216 = smul.addr %s215, 128
        %s217 = scalar_lea.vmem [#allocation5], %s216
        %p218 = pneg %p69
        %p219 = pneg %p66
        %p220 = pneg %p95
        %p221 = pneg %p92
        %s222 = sand.u32 %s82, 1
        %s223 = scalar_lea.sflag [#allocation4], %s222
        %s224 = sand.u32 %s82, 1
        %s225 = smul.addr %s224, 256
        %s226 = scalar_lea.vmem [#allocation7], %s225
        %s227 = smul.u32 16, %s22
        %s228 = smul.u32 16, %s22
        %s229 = smul.u32 16, %s22
        %v230 = vld [vmem:[%s192] sm:$0xff]
        %v231 = vld [vmem:[%s192 + $0x8] sm:$0xff]
        %v232 = vld [vmem:[%s192 + $0x10] sm:$0xff]
        %v233 = vld [vmem:[%s192 + $0x18] sm:$0xff]
        %v234 = vld [vmem:[%s192 + $0x20] sm:$0xff]
        %v235 = vld [vmem:[%s192 + $0x28] sm:$0xff]
        %v236 = vld [vmem:[%s192 + $0x30] sm:$0xff]
        %v237 = vld [vmem:[%s192 + $0x38] sm:$0xff]
        %v238 = vld [vmem:[%s192 + $0x40] sm:$0xff]
        %v239 = vld [vmem:[%s192 + $0x48] sm:$0xff]
        %v240 = vld [vmem:[%s192 + $0x50] sm:$0xff]
        %v241 = vld [vmem:[%s192 + $0x58] sm:$0xff]
        %v242 = vld [vmem:[%s192 + $0x60] sm:$0xff]
        %v243 = vld [vmem:[%s192 + $0x68] sm:$0xff]
        %v244 = vld [vmem:[%s192 + $0x70] sm:$0xff]
        %v245 = vld [vmem:[%s192 + $0x78] sm:$0xff]
        %v246 = vld [vmem:[%s192 + $0x80] sm:$0xff]
        %v247 = vld [vmem:[%s192 + $0x88] sm:$0xff]
        %v248 = vld [vmem:[%s192 + $0x90] sm:$0xff]
        %v249 = vld [vmem:[%s192 + $0x98] sm:$0xff]
        %v250 = vld [vmem:[%s192 + $0xa0] sm:$0xff]
        %v251 = vld [vmem:[%s192 + $0xa8] sm:$0xff]
        %v252 = vld [vmem:[%s192 + $0xb0] sm:$0xff]
        %v253 = vld [vmem:[%s192 + $0xb8] sm:$0xff]
        %v254 = vld [vmem:[%s192 + $0xc0] sm:$0xff]
        %v255 = vld [vmem:[%s192 + $0xc8] sm:$0xff]
        %v256 = vld [vmem:[%s192 + $0xd0] sm:$0xff]
        %v257 = vld [vmem:[%s192 + $0xd8] sm:$0xff]
        %v258 = vld [vmem:[%s192 + $0xe0] sm:$0xff]
        %v259 = vld [vmem:[%s192 + $0xe8] sm:$0xff]
        %v260 = vld [vmem:[%s192 + $0xf0] sm:$0xff]
        %v261 = vld [vmem:[%s192 + $0xf8] sm:$0xff]
        %v262 = vld [vmem:[%s201] sm:$0xff]
        %v263 = vld [vmem:[%s201 + $0x8] sm:$0xff]
        %v264 = vld [vmem:[%s201 + $0x10] sm:$0xff]
        %v265 = vld [vmem:[%s201 + $0x18] sm:$0xff]
        %v266 = vld [vmem:[%s201 + $0x20] sm:$0xff]
        %v267 = vld [vmem:[%s201 + $0x28] sm:$0xff]
        %v268 = vld [vmem:[%s201 + $0x30] sm:$0xff]
        %v269 = vld [vmem:[%s201 + $0x38] sm:$0xff]
        %v270 = vld [vmem:[%s201 + $0x40] sm:$0xff]
        %v271 = vld [vmem:[%s201 + $0x48] sm:$0xff]
        %v272 = vld [vmem:[%s201 + $0x50] sm:$0xff]
        %v273 = vld [vmem:[%s201 + $0x58] sm:$0xff]
        %v274 = vld [vmem:[%s201 + $0x60] sm:$0xff]
        %v275 = vld [vmem:[%s201 + $0x68] sm:$0xff]
        %v276 = vld [vmem:[%s201 + $0x70] sm:$0xff]
        %v277 = vld [vmem:[%s201 + $0x78] sm:$0xff]
        %v278 = vadd.f32 %v230, %v262
        %v279 = vadd.f32 %v231, %v263
        %v280 = vadd.f32 %v232, %v264
        %v281 = vadd.f32 %v233, %v265
        %v282 = vadd.f32 %v234, %v266
        %v283 = vadd.f32 %v235, %v267
        %v284 = vadd.f32 %v236, %v268
        %v285 = vadd.f32 %v237, %v269
        %v286 = vadd.f32 %v238, %v270
        %v287 = vadd.f32 %v239, %v271
        %v288 = vadd.f32 %v240, %v272
        %v289 = vadd.f32 %v241, %v273
        %v290 = vadd.f32 %v242, %v274
        %v291 = vadd.f32 %v243, %v275
        %v292 = vadd.f32 %v244, %v276
        %v293 = vadd.f32 %v245, %v277
        %v294 = vadd.f32 %v246, %v262
        %v295 = vadd.f32 %v247, %v263
        %v296 = vadd.f32 %v248, %v264
        %v297 = vadd.f32 %v249, %v265
        %v298 = vadd.f32 %v250, %v266
        %v299 = vadd.f32 %v251, %v267
        %v300 = vadd.f32 %v252, %v268
        %v301 = vadd.f32 %v253, %v269
        %v302 = vadd.f32 %v254, %v270
        %v303 = vadd.f32 %v255, %v271
        %v304 = vadd.f32 %v256, %v272
        %v305 = vadd.f32 %v257, %v273
        %v306 = vadd.f32 %v258, %v274
        %v307 = vadd.f32 %v259, %v275
        %v308 = vadd.f32 %v260, %v276
        %v309 = vadd.f32 %v261, %v277
        %vm310 = vcmask 261120
        %311 = vst.msk [vmem:[%s226] sm:$0xff] %vm310, %v278
        %312 = vst.msk [vmem:[%s226 + $0x8] sm:$0xff] %vm310, %v279
        %313 = vst.msk [vmem:[%s226 + $0x10] sm:$0xff] %vm310, %v280
        %314 = vst.msk [vmem:[%s226 + $0x18] sm:$0xff] %vm310, %v281
        %315 = vst.msk [vmem:[%s226 + $0x20] sm:$0xff] %vm310, %v282
        %316 = vst.msk [vmem:[%s226 + $0x28] sm:$0xff] %vm310, %v283
        %317 = vst.msk [vmem:[%s226 + $0x30] sm:$0xff] %vm310, %v284
        %318 = vst.msk [vmem:[%s226 + $0x38] sm:$0xff] %vm310, %v285
        %319 = vst.msk [vmem:[%s226 + $0x40] sm:$0xff] %vm310, %v286
        %320 = vst.msk [vmem:[%s226 + $0x48] sm:$0xff] %vm310, %v287
        %321 = vst.msk [vmem:[%s226 + $0x50] sm:$0xff] %vm310, %v288
        %322 = vst.msk [vmem:[%s226 + $0x58] sm:$0xff] %vm310, %v289
        %323 = vst.msk [vmem:[%s226 + $0x60] sm:$0xff] %vm310, %v290
        %324 = vst.msk [vmem:[%s226 + $0x68] sm:$0xff] %vm310, %v291
        %325 = vst.msk [vmem:[%s226 + $0x70] sm:$0xff] %vm310, %v292
        %326 = vst.msk [vmem:[%s226 + $0x78] sm:$0xff] %vm310, %v293
        %327 = vst.msk [vmem:[%s226 + $0x80] sm:$0xff] %vm310, %v294
        %328 = vst.msk [vmem:[%s226 + $0x88] sm:$0xff] %vm310, %v295
        %329 = vst.msk [vmem:[%s226 + $0x90] sm:$0xff] %vm310, %v296
        %330 = vst.msk [vmem:[%s226 + $0x98] sm:$0xff] %vm310, %v297
        %331 = vst.msk [vmem:[%s226 + $0xa0] sm:$0xff] %vm310, %v298
        %332 = vst.msk [vmem:[%s226 + $0xa8] sm:$0xff] %vm310, %v299
        %333 = vst.msk [vmem:[%s226 + $0xb0] sm:$0xff] %vm310, %v300
        %334 = vst.msk [vmem:[%s226 + $0xb8] sm:$0xff] %vm310, %v301
        %335 = vst.msk [vmem:[%s226 + $0xc0] sm:$0xff] %vm310, %v302
        %336 = vst.msk [vmem:[%s226 + $0xc8] sm:$0xff] %vm310, %v303
        %337 = vst.msk [vmem:[%s226 + $0xd0] sm:$0xff] %vm310, %v304
        %338 = vst.msk [vmem:[%s226 + $0xd8] sm:$0xff] %vm310, %v305
        %339 = vst.msk [vmem:[%s226 + $0xe0] sm:$0xff] %vm310, %v306
        %340 = vst.msk [vmem:[%s226 + $0xe8] sm:$0xff] %vm310, %v307
        %341 = vst.msk [vmem:[%s226 + $0xf0] sm:$0xff] %vm310, %v308
        %342 = vst.msk [vmem:[%s226 + $0xf8] sm:$0xff] %vm310, %v309
        %s343 = sand.u32 %s82, 1
        %s344 = scalar_lea.sflag [#allocation4], %s343
        %s345 = sand.u32 %s82, 1
        %s346 = smul.addr %s345, 256
        %s347 = scalar_lea.vmem [#allocation7], %s346
        // Predicated region
        $region37: #{learnt_positional_embedding.1} parent=27 // pred_check
          %p348 = pneg %p92
        $region38: #{learnt_positional_embedding.1} parent=27 // pred_check_branch
          %350 = sbr.rel (%p348) target = $region40
        $region39: #{learnt_positional_embedding.1} parent=27 // pred_region
          #allocation11 [shape = 'u32[6]{0}', space=smem, size = 0x18, scoped, tag = 'DMA stride descriptor']
          %s351 = smul.u32 16, %s22
          %s353 = ssub.s32 4096, 4096
          %354 = vsyncadd %s344, %s353
          %s355 = smul.addr %s351, 128
          %s356 = scalar_lea.hbm %s2, %s355
          %s358 = sshll.u32 1, 14
          %s359 = sxor.u32 4294967295, %s358
          %s362 = sshll.u32 7, 18
          %s363 = sxor.u32 4294967295, %s362
          %s364 = sand.u32 0, %s363
          %s366 = sor.u32 %s364, 0
          %s368 = sshll.u32 3, 24
          %s369 = sxor.u32 4294967295, %s368
          %s370 = sand.u32 %s366, %s369
          %s372 = sor.u32 %s370, 0
          %s373 = sshll.u32 %s347, 4
          %s374 = int_to_ptr.vmem [resolvable:$true] %s373
          %380 = sst [smem:[#allocation11]] 2048
          %s381 = scalar_lea.smem [#allocation11], 1
          %382 = sst [smem:[%s381]] 4096
          %s383 = scalar_lea.smem [#allocation11], 2
          %384 = sst [smem:[%s383]] 16
          %s385 = scalar_lea.smem [#allocation11], 3
          %386 = sst [smem:[%s385]] 128
          %s387 = scalar_lea.smem [#allocation11], 4
          %388 = sst [smem:[%s387]] 128
          %s389 = scalar_lea.smem [#allocation11], 5
          %390 = sst [smem:[%s389]] 8
          %392 = dma.general %s374, 4096, %s356, %s344, [#allocation10], [#allocation11], %s372, 0
        $region40: #{learnt_positional_embedding.1} parent=27 // pred_fallthru
          _
      $region28: #{learnt_positional_embedding.1} parent=5 // pred_fallthru
        _
      %p393 = scmp.le.s32.totalorder 2, %s17
      // Predicated region
      $region41: #{learnt_positional_embedding.1} parent=5 // pred_check
        %p394 = pneg %p393
      $region42: #{learnt_positional_embedding.1} parent=5 // pred_check_branch
        %396 = sbr.rel (%p394) target = $region44
      $region43: #{learnt_positional_embedding.1} parent=5 // pred_region
        %s397 = ssub.s32 %s17, 2
        // Predicated region
        $region45: #{learnt_positional_embedding.1} parent=43 // pred_check
          %p398 = pneg %p98
        $region46: #{learnt_positional_embedding.1} parent=43 // pred_check_branch
          %400 = sbr.rel (%p398) target = $region48
        $region47: #{learnt_positional_embedding.1} parent=43 // pred_region
          %s401 = sand.u32 %s83, 1
          %s402 = scalar_lea.sflag [#allocation4], %s401
          %s403 = sand.u32 %s83, 1
          %s404 = smul.addr %s403, 256
          %s405 = scalar_lea.vmem [#allocation7], %s404
          %406 = dma.done %s402, 4096
        $region48: #{learnt_positional_embedding.1} parent=43 // pred_fallthru
          _
      $region44: #{learnt_positional_embedding.1} parent=5 // pred_fallthru
        _
    $region6: #{learnt_positional_embedding.1} parent=1 // loop_footer
      %s21 = sadd.s32 1, %s17
    $region7: #{learnt_positional_embedding.1} parent=1 // loop_footer_branch
      %16 = sbr.rel target = $region3
    $region8: #{learnt_positional_embedding.1} parent=1 // loop_exit
      _
    %407 = vsyncpa [#allocation3], 1
    %s408 = scalar_lea.sflag [#allocation3], 1
    %409 = vsyncpa %s408, 1
    %410 = vsyncpa [#allocation6], 1
    %s411 = scalar_lea.sflag [#allocation6], 1
    %412 = vsyncpa %s411, 1
    %413 = vsyncpa [#allocation4], 1
    %s414 = scalar_lea.sflag [#allocation4], 1
    %415 = vsyncpa %s414, 1

</llo_original>
